<compile_context>
chip_gen: v6e
topology: v6e:2x2x1
jax: 0.10.0
libtpu: 0.0.40
codegen_flags: <defaults>
</compile_context>

<pallas_src>
import functools

import jax
import jax.numpy as jnp
from jax.experimental import pallas as pl
from jax.experimental.pallas import tpu as pltpu

EMBED_SIZE = 100   # logical embedding dim (`embed_size` in the torch module)


# ---------------------------------------------------------------------------
# Pallas kernel: gather TM rows per grid step from the VMEM-resident table.
# ---------------------------------------------------------------------------
def _gather_block_kernel(ids_ref, table_ref, out_ref, *, tm, n_tokens, vocab_size):
    # ids_ref:   (N,) int32 SMEM (scalar prefetch) -- all token ids.
    # table_ref: (V, E) f32 VMEM -- whole table, DMA'd from HBM once (constant index).
    # out_ref:   (TM, E) f32 VMEM -- output slab for this grid step.
    base = pl.program_id(0) * tm
    for j in range(tm):          # TM is small & static: unrolled row copies in VMEM
        # Clamp the token index so a (possibly partial) last block reads a valid id,
        # and clamp the id itself so an out-of-range token cannot read a wrong VMEM
        # region (tokenize() already guarantees in-range ids).
        idx = jnp.minimum(base + j, n_tokens - 1)
        tok = jnp.clip(ids_ref[idx], 0, vocab_size - 1)
        out_ref[pl.ds(j, 1), :] = table_ref[pl.ds(tok, 1), :]


def _pick_tm(n, cap=256):
    """Tokens per grid step: sublane-dense (>=8) and dividing N when possible."""
    for cand in (256, 128, 64, 32, 16, 8):
        if cand <= cap and n % cand == 0:
            return cand
    if n <= cap:
        return n          # full-extent token block (always a legal block shape)
    return 128            # ragged edge: Pallas masks the out-of-bounds output rows


def embedding_lookup(ids_flat, table):
    """ids_flat: (N,) int32, table: (V, E) f32  ->  (N, E) f32 gathered rows."""
    n = int(ids_flat.shape[0])
    v, e = table.shape
    tm = _pick_tm(n)
    grid = (pl.cdiv(n, tm),)

    kernel = functools.partial(
        _gather_block_kernel, tm=tm, n_tokens=n, vocab_size=v)

    grid_spec = pltpu.PrefetchScalarGridSpec(
        num_scalar_prefetch=1,            # ids -> SMEM before the grid runs
        grid=grid,
        in_specs=[
            # Whole table resident in VMEM; constant block index => single HBM DMA.
            pl.BlockSpec((v, e), lambda i, ids: (0, 0)),
        ],
        out_specs=pl.BlockSpec((tm, e), lambda i, ids: (i, 0)),
    )

    # Effectively a gather: ~0 FLOPs, DMA-bound (table read once + output write).
    cost = pl.CostEstimate(
        flops=0,
        transcendentals=0,
        bytes_accessed=v * e * 4 + n * e * 4 + n * 4,
    )

    return pl.pallas_call(
        kernel,
        out_shape=jax.ShapeDtypeStruct((n, e), table.dtype),
        grid_spec=grid_spec,
        compiler_params=pltpu.CompilerParams(
            dimension_semantics=("parallel",)),   # shard token blocks across v7x's 2 TCs
        cost_estimate=cost,
    )(ids_flat, table)


# ---------------------------------------------------------------------------
# Python glue: vocab / tokenization (string processing, no Pallas equivalent).
# ---------------------------------------------------------------------------
def build_vocab():
    # TODO(synk): original module reads vocab.txt from disk; built in-script here.
    words = ['[PAD]', '[UNK]', 'the', 'movie', 'was', 'great', 'i', 'loved',
             'it', 'a', 'bit', 'slow', 'but', 'fun', 'really', 'bad']
    return {w: i for i, w in enumerate(words)}


def tokenize(text_list, vocab):
    # Note: pads to the runtime max sentence length, so each distinct (B, S) shape
    # retraces/recompiles the kernel (fine for this demo).
    input_ids = [
        [vocab[w if w in vocab else '[UNK]'] for w in sentence.split(' ')]
        for sentence in text_list
    ]
    seq_len = max(len(g) for g in input_ids)
    input_ids = [g + [0] * (seq_len - len(g)) for g in input_ids]
    return jnp.asarray(input_ids, dtype=jnp.int32)   # (B, S)


class PallasEmbedding:
    """JAX/Pallas counterpart of TorchEmbedding."""

    def __init__(self, key):
        self.vocab = build_vocab()
        # torch.nn.Embedding default init is N(0, 1).
        self.table = jax.random.normal(
            key, (len(self.vocab), EMBED_SIZE), dtype=jnp.float32)

    def __call__(self, text_list):
        ids = tokenize(text_list, self.vocab)            # (B, S)
        b, s = ids.shape
        # Fuse torch's .permute(1, 0, 2): transpose the tiny int32 id matrix so the
        # kernel output is already laid out as (S, B, E).
        ids_sb = ids.T.reshape(s * b)                    # (S*B,) int32
        flat = embedding_lookup(ids_sb, self.table)      # (S*B, EMBED_SIZE)
        return flat.reshape(s, b, EMBED_SIZE)            # free reshape, no slice


if __name__ == "__main__":
    key = jax.random.PRNGKey(0)
    model = PallasEmbedding(key)

    text_list = [
        "the movie was great i loved it",
        "it was a bit slow but astonishing",   # 'astonishing' -> [UNK]
    ]

    out = jax.block_until_ready(model(text_list))

    # Reference check in plain JAX (table gather + permute). Bit-exact.
    ids = tokenize(text_list, model.vocab)               # (B, S)
    ref = jnp.take(model.table, ids, axis=0).transpose(1, 0, 2)
    assert out.shape == ref.shape == (ids.shape[1], ids.shape[0], EMBED_SIZE)
    assert out.dtype == jnp.float32
    assert jnp.array_equal(out, ref), "mismatch vs reference gather"

    print("KERNEL_OK")
</pallas_src>

<mosaic_0001>
module attributes {stable_mosaic.version = 11 : i64} {
  func.func @_gather_block_kernel(%arg0: i32, %arg1: memref<14xi32, #tpu.memory_space<smem>>, %arg2: memref<16x100xf32, #tpu.memory_space<vmem>>, %arg3: memref<14x100xf32, #tpu.memory_space<vmem>>) attributes {dimension_semantics = [#tpu.dimension_semantics<parallel>], iteration_bounds = array<i64: 1>, scalar_prefetch = 1 : i64, scratch_operands = 0 : i64, tpu.core_type = #tpu.core_type<tc>, window_params = [{pipeline_mode = #tpu.pipeline_mode<synchronous>, transform_indices = @transform_0, window_bounds = array<i64: 16, 100>}, {transform_indices = @transform_1, window_bounds = array<i64: 14, 100>}]} {
    %c14_i32 = arith.constant 14 : i32
    %0 = arith.muli %arg0, %c14_i32 : i32
    %c0_i32 = arith.constant 0 : i32
    %1 = arith.addi %0, %c0_i32 : i32
    %c13_i32 = arith.constant 13 : i32
    %2 = arith.minsi %1, %c13_i32 : i32
    %3 = arith.index_cast %2 : i32 to index
    %4 = memref.load %arg1[%3] : memref<14xi32, #tpu.memory_space<smem>>
    %c0_i32_0 = arith.constant 0 : i32
    %c15_i32 = arith.constant 15 : i32
    %5 = arith.maxsi %c0_i32_0, %4 : i32
    %6 = arith.minsi %c15_i32, %5 : i32
    %7 = arith.index_cast %6 : i32 to index
    %c0 = arith.constant 0 : index
    %8 = vector.load %arg2[%7, %c0] : memref<16x100xf32, #tpu.memory_space<vmem>>, vector<1x100xf32>
    %c0_1 = arith.constant 0 : index
    %c0_2 = arith.constant 0 : index
    %9 = vector.load %arg3[%c0_1, %c0_2] : memref<14x100xf32, #tpu.memory_space<vmem>>, vector<1x100xf32>
    tpu.vector_store %arg3[%c0_1, %c0_2], %8 {strides = array<i32>} : memref<14x100xf32, #tpu.memory_space<vmem>>, vector<1x100xf32>,
    %c1_i32 = arith.constant 1 : i32
    %10 = arith.addi %0, %c1_i32 : i32
    %c13_i32_3 = arith.constant 13 : i32
    %11 = arith.minsi %10, %c13_i32_3 : i32
    %12 = arith.index_cast %11 : i32 to index
    %13 = memref.load %arg1[%12] : memref<14xi32, #tpu.memory_space<smem>>
    %c0_i32_4 = arith.constant 0 : i32
    %c15_i32_5 = arith.constant 15 : i32
    %14 = arith.maxsi %c0_i32_4, %13 : i32
    %15 = arith.minsi %c15_i32_5, %14 : i32
    %16 = arith.index_cast %15 : i32 to index
    %c0_6 = arith.constant 0 : index
    %17 = vector.load %arg2[%16, %c0_6] : memref<16x100xf32, #tpu.memory_space<vmem>>, vector<1x100xf32>
    %c1 = arith.constant 1 : index
    %c0_7 = arith.constant 0 : index
    %18 = vector.load %arg3[%c1, %c0_7] : memref<14x100xf32, #tpu.memory_space<vmem>>, vector<1x100xf32>
    tpu.vector_store %arg3[%c1, %c0_7], %17 {strides = array<i32>} : memref<14x100xf32, #tpu.memory_space<vmem>>, vector<1x100xf32>,
    %c2_i32 = arith.constant 2 : i32
    %19 = arith.addi %0, %c2_i32 : i32
    %c13_i32_8 = arith.constant 13 : i32
    %20 = arith.minsi %19, %c13_i32_8 : i32
    %21 = arith.index_cast %20 : i32 to index
    %22 = memref.load %arg1[%21] : memref<14xi32, #tpu.memory_space<smem>>
    %c0_i32_9 = arith.constant 0 : i32
    %c15_i32_10 = arith.constant 15 : i32
    %23 = arith.maxsi %c0_i32_9, %22 : i32
    %24 = arith.minsi %c15_i32_10, %23 : i32
    %25 = arith.index_cast %24 : i32 to index
    %c0_11 = arith.constant 0 : index
    %26 = vector.load %arg2[%25, %c0_11] : memref<16x100xf32, #tpu.memory_space<vmem>>, vector<1x100xf32>
    %c2 = arith.constant 2 : index
    %c0_12 = arith.constant 0 : index
    %27 = vector.load %arg3[%c2, %c0_12] : memref<14x100xf32, #tpu.memory_space<vmem>>, vector<1x100xf32>
    tpu.vector_store %arg3[%c2, %c0_12], %26 {strides = array<i32>} : memref<14x100xf32, #tpu.memory_space<vmem>>, vector<1x100xf32>,
    %c3_i32 = arith.constant 3 : i32
    %28 = arith.addi %0, %c3_i32 : i32
    %c13_i32_13 = arith.constant 13 : i32
    %29 = arith.minsi %28, %c13_i32_13 : i32
    %30 = arith.index_cast %29 : i32 to index
    %31 = memref.load %arg1[%30] : memref<14xi32, #tpu.memory_space<smem>>
    %c0_i32_14 = arith.constant 0 : i32
    %c15_i32_15 = arith.constant 15 : i32
    %32 = arith.maxsi %c0_i32_14, %31 : i32
    %33 = arith.minsi %c15_i32_15, %32 : i32
    %34 = arith.index_cast %33 : i32 to index
    %c0_16 = arith.constant 0 : index
    %35 = vector.load %arg2[%34, %c0_16] : memref<16x100xf32, #tpu.memory_space<vmem>>, vector<1x100xf32>
    %c3 = arith.constant 3 : index
    %c0_17 = arith.constant 0 : index
    %36 = vector.load %arg3[%c3, %c0_17] : memref<14x100xf32, #tpu.memory_space<vmem>>, vector<1x100xf32>
    tpu.vector_store %arg3[%c3, %c0_17], %35 {strides = array<i32>} : memref<14x100xf32, #tpu.memory_space<vmem>>, vector<1x100xf32>,
    %c4_i32 = arith.constant 4 : i32
    %37 = arith.addi %0, %c4_i32 : i32
    %c13_i32_18 = arith.constant 13 : i32
    %38 = arith.minsi %37, %c13_i32_18 : i32
    %39 = arith.index_cast %38 : i32 to index
    %40 = memref.load %arg1[%39] : memref<14xi32, #tpu.memory_space<smem>>
    %c0_i32_19 = arith.constant 0 : i32
    %c15_i32_20 = arith.constant 15 : i32
    %41 = arith.maxsi %c0_i32_19, %40 : i32
    %42 = arith.minsi %c15_i32_20, %41 : i32
    %43 = arith.index_cast %42 : i32 to index
    %c0_21 = arith.constant 0 : index
    %44 = vector.load %arg2[%43, %c0_21] : memref<16x100xf32, #tpu.memory_space<vmem>>, vector<1x100xf32>
    %c4 = arith.constant 4 : index
    %c0_22 = arith.constant 0 : index
    %45 = vector.load %arg3[%c4, %c0_22] : memref<14x100xf32, #tpu.memory_space<vmem>>, vector<1x100xf32>
    tpu.vector_store %arg3[%c4, %c0_22], %44 {strides = array<i32>} : memref<14x100xf32, #tpu.memory_space<vmem>>, vector<1x100xf32>,
    %c5_i32 = arith.constant 5 : i32
    %46 = arith.addi %0, %c5_i32 : i32
    %c13_i32_23 = arith.constant 13 : i32
    %47 = arith.minsi %46, %c13_i32_23 : i32
    %48 = arith.index_cast %47 : i32 to index
    %49 = memref.load %arg1[%48] : memref<14xi32, #tpu.memory_space<smem>>
    %c0_i32_24 = arith.constant 0 : i32
    %c15_i32_25 = arith.constant 15 : i32
    %50 = arith.maxsi %c0_i32_24, %49 : i32
    %51 = arith.minsi %c15_i32_25, %50 : i32
    %52 = arith.index_cast %51 : i32 to index
    %c0_26 = arith.constant 0 : index
    %53 = vector.load %arg2[%52, %c0_26] : memref<16x100xf32, #tpu.memory_space<vmem>>, vector<1x100xf32>
    %c5 = arith.constant 5 : index
    %c0_27 = arith.constant 0 : index
    %54 = vector.load %arg3[%c5, %c0_27] : memref<14x100xf32, #tpu.memory_space<vmem>>, vector<1x100xf32>
    tpu.vector_store %arg3[%c5, %c0_27], %53 {strides = array<i32>} : memref<14x100xf32, #tpu.memory_space<vmem>>, vector<1x100xf32>,
    %c6_i32 = arith.constant 6 : i32
    %55 = arith.addi %0, %c6_i32 : i32
    %c13_i32_28 = arith.constant 13 : i32
    %56 = arith.minsi %55, %c13_i32_28 : i32
    %57 = arith.index_cast %56 : i32 to index
    %58 = memref.load %arg1[%57] : memref<14xi32, #tpu.memory_space<smem>>
    %c0_i32_29 = arith.constant 0 : i32
    %c15_i32_30 = arith.constant 15 : i32
    %59 = arith.maxsi %c0_i32_29, %58 : i32
    %60 = arith.minsi %c15_i32_30, %59 : i32
    %61 = arith.index_cast %60 : i32 to index
    %c0_31 = arith.constant 0 : index
    %62 = vector.load %arg2[%61, %c0_31] : memref<16x100xf32, #tpu.memory_space<vmem>>, vector<1x100xf32>
    %c6 = arith.constant 6 : index
    %c0_32 = arith.constant 0 : index
    %63 = vector.load %arg3[%c6, %c0_32] : memref<14x100xf32, #tpu.memory_space<vmem>>, vector<1x100xf32>
    tpu.vector_store %arg3[%c6, %c0_32], %62 {strides = array<i32>} : memref<14x100xf32, #tpu.memory_space<vmem>>, vector<1x100xf32>,
    %c7_i32 = arith.constant 7 : i32
    %64 = arith.addi %0, %c7_i32 : i32
    %c13_i32_33 = arith.constant 13 : i32
    %65 = arith.minsi %64, %c13_i32_33 : i32
    %66 = arith.index_cast %65 : i32 to index
    %67 = memref.load %arg1[%66] : memref<14xi32, #tpu.memory_space<smem>>
    %c0_i32_34 = arith.constant 0 : i32
    %c15_i32_35 = arith.constant 15 : i32
    %68 = arith.maxsi %c0_i32_34, %67 : i32
    %69 = arith.minsi %c15_i32_35, %68 : i32
    %70 = arith.index_cast %69 : i32 to index
    %c0_36 = arith.constant 0 : index
    %71 = vector.load %arg2[%70, %c0_36] : memref<16x100xf32, #tpu.memory_space<vmem>>, vector<1x100xf32>
    %c7 = arith.constant 7 : index
    %c0_37 = arith.constant 0 : index
    %72 = vector.load %arg3[%c7, %c0_37] : memref<14x100xf32, #tpu.memory_space<vmem>>, vector<1x100xf32>
    tpu.vector_store %arg3[%c7, %c0_37], %71 {strides = array<i32>} : memref<14x100xf32, #tpu.memory_space<vmem>>, vector<1x100xf32>,
    %c8_i32 = arith.constant 8 : i32
    %73 = arith.addi %0, %c8_i32 : i32
    %c13_i32_38 = arith.constant 13 : i32
    %74 = arith.minsi %73, %c13_i32_38 : i32
    %75 = arith.index_cast %74 : i32 to index
    %76 = memref.load %arg1[%75] : memref<14xi32, #tpu.memory_space<smem>>
    %c0_i32_39 = arith.constant 0 : i32
    %c15_i32_40 = arith.constant 15 : i32
    %77 = arith.maxsi %c0_i32_39, %76 : i32
    %78 = arith.minsi %c15_i32_40, %77 : i32
    %79 = arith.index_cast %78 : i32 to index
    %c0_41 = arith.constant 0 : index
    %80 = vector.load %arg2[%79, %c0_41] : memref<16x100xf32, #tpu.memory_space<vmem>>, vector<1x100xf32>
    %c8 = arith.constant 8 : index
    %c0_42 = arith.constant 0 : index
    %81 = vector.load %arg3[%c8, %c0_42] : memref<14x100xf32, #tpu.memory_space<vmem>>, vector<1x100xf32>
    tpu.vector_store %arg3[%c8, %c0_42], %80 {strides = array<i32>} : memref<14x100xf32, #tpu.memory_space<vmem>>, vector<1x100xf32>,
    %c9_i32 = arith.constant 9 : i32
    %82 = arith.addi %0, %c9_i32 : i32
    %c13_i32_43 = arith.constant 13 : i32
    %83 = arith.minsi %82, %c13_i32_43 : i32
    %84 = arith.index_cast %83 : i32 to index
    %85 = memref.load %arg1[%84] : memref<14xi32, #tpu.memory_space<smem>>
    %c0_i32_44 = arith.constant 0 : i32
    %c15_i32_45 = arith.constant 15 : i32
    %86 = arith.maxsi %c0_i32_44, %85 : i32
    %87 = arith.minsi %c15_i32_45, %86 : i32
    %88 = arith.index_cast %87 : i32 to index
    %c0_46 = arith.constant 0 : index
    %89 = vector.load %arg2[%88, %c0_46] : memref<16x100xf32, #tpu.memory_space<vmem>>, vector<1x100xf32>
    %c9 = arith.constant 9 : index
    %c0_47 = arith.constant 0 : index
    %90 = vector.load %arg3[%c9, %c0_47] : memref<14x100xf32, #tpu.memory_space<vmem>>, vector<1x100xf32>
    tpu.vector_store %arg3[%c9, %c0_47], %89 {strides = array<i32>} : memref<14x100xf32, #tpu.memory_space<vmem>>, vector<1x100xf32>,
    %c10_i32 = arith.constant 10 : i32
    %91 = arith.addi %0, %c10_i32 : i32
    %c13_i32_48 = arith.constant 13 : i32
    %92 = arith.minsi %91, %c13_i32_48 : i32
    %93 = arith.index_cast %92 : i32 to index
    %94 = memref.load %arg1[%93] : memref<14xi32, #tpu.memory_space<smem>>
    %c0_i32_49 = arith.constant 0 : i32
    %c15_i32_50 = arith.constant 15 : i32
    %95 = arith.maxsi %c0_i32_49, %94 : i32
    %96 = arith.minsi %c15_i32_50, %95 : i32
    %97 = arith.index_cast %96 : i32 to index
    %c0_51 = arith.constant 0 : index
    %98 = vector.load %arg2[%97, %c0_51] : memref<16x100xf32, #tpu.memory_space<vmem>>, vector<1x100xf32>
    %c10 = arith.constant 10 : index
    %c0_52 = arith.constant 0 : index
    %99 = vector.load %arg3[%c10, %c0_52] : memref<14x100xf32, #tpu.memory_space<vmem>>, vector<1x100xf32>
    tpu.vector_store %arg3[%c10, %c0_52], %98 {strides = array<i32>} : memref<14x100xf32, #tpu.memory_space<vmem>>, vector<1x100xf32>,
    %c11_i32 = arith.constant 11 : i32
    %100 = arith.addi %0, %c11_i32 : i32
    %c13_i32_53 = arith.constant 13 : i32
    %101 = arith.minsi %100, %c13_i32_53 : i32
    %102 = arith.index_cast %101 : i32 to index
    %103 = memref.load %arg1[%102] : memref<14xi32, #tpu.memory_space<smem>>
    %c0_i32_54 = arith.constant 0 : i32
    %c15_i32_55 = arith.constant 15 : i32
    %104 = arith.maxsi %c0_i32_54, %103 : i32
    %105 = arith.minsi %c15_i32_55, %104 : i32
    %106 = arith.index_cast %105 : i32 to index
    %c0_56 = arith.constant 0 : index
    %107 = vector.load %arg2[%106, %c0_56] : memref<16x100xf32, #tpu.memory_space<vmem>>, vector<1x100xf32>
    %c11 = arith.constant 11 : index
    %c0_57 = arith.constant 0 : index
    %108 = vector.load %arg3[%c11, %c0_57] : memref<14x100xf32, #tpu.memory_space<vmem>>, vector<1x100xf32>
    tpu.vector_store %arg3[%c11, %c0_57], %107 {strides = array<i32>} : memref<14x100xf32, #tpu.memory_space<vmem>>, vector<1x100xf32>,
    %c12_i32 = arith.constant 12 : i32
    %109 = arith.addi %0, %c12_i32 : i32
    %c13_i32_58 = arith.constant 13 : i32
    %110 = arith.minsi %109, %c13_i32_58 : i32
    %111 = arith.index_cast %110 : i32 to index
    %112 = memref.load %arg1[%111] : memref<14xi32, #tpu.memory_space<smem>>
    %c0_i32_59 = arith.constant 0 : i32
    %c15_i32_60 = arith.constant 15 : i32
    %113 = arith.maxsi %c0_i32_59, %112 : i32
    %114 = arith.minsi %c15_i32_60, %113 : i32
    %115 = arith.index_cast %114 : i32 to index
    %c0_61 = arith.constant 0 : index
    %116 = vector.load %arg2[%115, %c0_61] : memref<16x100xf32, #tpu.memory_space<vmem>>, vector<1x100xf32>
    %c12 = arith.constant 12 : index
    %c0_62 = arith.constant 0 : index
    %117 = vector.load %arg3[%c12, %c0_62] : memref<14x100xf32, #tpu.memory_space<vmem>>, vector<1x100xf32>
    tpu.vector_store %arg3[%c12, %c0_62], %116 {strides = array<i32>} : memref<14x100xf32, #tpu.memory_space<vmem>>, vector<1x100xf32>,
    %c13_i32_63 = arith.constant 13 : i32
    %118 = arith.addi %0, %c13_i32_63 : i32
    %c13_i32_64 = arith.constant 13 : i32
    %119 = arith.minsi %118, %c13_i32_64 : i32
    %120 = arith.index_cast %119 : i32 to index
    %121 = memref.load %arg1[%120] : memref<14xi32, #tpu.memory_space<smem>>
    %c0_i32_65 = arith.constant 0 : i32
    %c15_i32_66 = arith.constant 15 : i32
    %122 = arith.maxsi %c0_i32_65, %121 : i32
    %123 = arith.minsi %c15_i32_66, %122 : i32
    %124 = arith.index_cast %123 : i32 to index
    %c0_67 = arith.constant 0 : index
    %125 = vector.load %arg2[%124, %c0_67] : memref<16x100xf32, #tpu.memory_space<vmem>>, vector<1x100xf32>
    %c13 = arith.constant 13 : index
    %c0_68 = arith.constant 0 : index
    %126 = vector.load %arg3[%c13, %c0_68] : memref<14x100xf32, #tpu.memory_space<vmem>>, vector<1x100xf32>
    tpu.vector_store %arg3[%c13, %c0_68], %125 {strides = array<i32>} : memref<14x100xf32, #tpu.memory_space<vmem>>, vector<1x100xf32>,
    return
  }
  func.func @transform_0(%arg0: i32, %arg1: memref<14xi32, #tpu.memory_space<smem>>) -> (i32, i32) {
    %c0_i32 = arith.constant 0 : i32
    %c0_i32_0 = arith.constant 0 : i32
    %c0_i32_1 = arith.constant 0 : i32
    return %c0_i32, %c0_i32_0 : i32, i32
  }
  func.func @transform_1(%arg0: i32, %arg1: memref<14xi32, #tpu.memory_space<smem>>) -> (i32, i32) {
    %c0_i32 = arith.constant 0 : i32
    %c0_i32_0 = arith.constant 0 : i32
    return %arg0, %c0_i32 : i32, i32
  }
}

</mosaic_0001>

<llo_original>
// kernel: tpu_custom_call.1
$region0: #{tpu_custom_call.1}
  #allocation0 [shape = 'u32[]', space=smem, size = 0x4, offset = 0x4, fixed_abs, tag = 'smem constant byte address 0x4 - core index']
  #allocation1 [shape = 'u32[144,128]{1,0:T(1,128)}', space=vmem, size = 0x12000, scoped, tag = 'internal scratch']
  #allocation2 [shape = 's32[1]{0}', space=sflag, size = 0x4, scoped, tag = 'scoped memory for tpu_custom_call.1']
  #allocation3 [shape = 'u8[512]{0}', space=smem, size = 0x200, scoped, tag = 'prefetched SMEM operand 0']
  %s0 = inlined_call_operand.hbm [shape: s32[14], index: 0, kind: input, shape index: {}]
  %s1 = inlined_call_operand.hbm [shape: f32[16,100], index: 1, kind: input, shape index: {}]
  %s2 = inlined_call_operand.hbm [shape: f32[14,100], index: 2, kind: output, shape index: {}]
  %s3 = sld [smem:[#allocation0]]
  $region18: #{tpu_custom_call.1} parent=0
    _
  %s5 = ssub.s32 1, %s3
  %s6 = scalar_select 0, %s5, %s3
  %8 = dma.hbm_to_smem %s0, 16, [#allocation3], [#allocation2]
  %9 = dma.done [#allocation2], 16
  %10 = sfence
  $region1: #{tpu_custom_call.1} parent=0
    #allocation4 [shape = 'u8[8192]{0}', space=vmem, size = 0x2000, scoped, tag = 'input window, operand 1, single buffered']
    #allocation5 [shape = 's32[1]{0}', space=sflag, size = 0x4, scoped, tag = 'scoped memory for tpu_custom_call.1']
    #allocation6 [shape = 's32[1]{0}', space=sflag, size = 0x4, scoped, tag = 'scoped memory for tpu_custom_call.1']
    #allocation7 [shape = 'u8[8192]{0}', space=vmem, size = 0x2000, scoped, tag = 'output window, operand 0, single buffered']
    %11 = vsyncpa [#allocation5], 0
    %12 = vsyncpa [#allocation6], 0
    // Predicated region
    $region2: #{tpu_custom_call.1} parent=1 // pred_check
      _
    $region3: #{tpu_custom_call.1} parent=1 // pred_check_branch
      %14 = sbr.rel (0) target = $region5
    $region4: #{tpu_custom_call.1} parent=1 // pred_region
      %s16 = ssub.s32 256, 256
      %17 = vsyncadd [#allocation5], %s16
      %s18 = sshll.u32 [#allocation4], 4
      %s19 = int_to_ptr.vmem [resolvable:$true] %s18
      %24 = dma.hbm_to_vmem [thread:$0]  %s1, 256, %s19, [#allocation5], 128, 128, 8
    $region5: #{tpu_custom_call.1} parent=1 // pred_fallthru
      _
    // Predicated region
    $region6: #{tpu_custom_call.1} parent=1 // pred_check
      _
    $region7: #{tpu_custom_call.1} parent=1 // pred_check_branch
      %26 = sbr.rel (0) target = $region9
    $region8: #{tpu_custom_call.1} parent=1 // pred_region
      %27 = dma.done [#allocation5], 256
    $region9: #{tpu_custom_call.1} parent=1 // pred_fallthru
      _
    %s28 = smul.u32 0, 14
    %p29 = scmp.lt.s32.totalorder %s28, 13
    %s30 = scalar_select %p29, %s28, 13
    %s31 = sld [smem:[#allocation3 + %s30]]
    %p32 = scmp.gt.s32.totalorder %s31, 0
    %s33 = scalar_select %p32, %s31, 0
    %p34 = scmp.lt.s32.totalorder %s33, 15
    %s35 = scalar_select %p34, %s33, 15
    %s36 = scalar_lea.vmem [#allocation4], %s35
    %v37 = vld [vmem:[%s36] sm:$0x1]
    %vm38 = vcmask 811008
    %39 = vst.msk [vmem:[#allocation7] sm:$0x1] %vm38, %v37
    %s40 = sadd.s32 %s28, 1
    %p41 = scmp.lt.s32.totalorder %s40, 13
    %s42 = scalar_select %p41, %s40, 13
    %s43 = sld [smem:[#allocation3 + %s42]]
    %p44 = scmp.gt.s32.totalorder %s43, 0
    %s45 = scalar_select %p44, %s43, 0
    %p46 = scmp.lt.s32.totalorder %s45, 15
    %s47 = scalar_select %p46, %s45, 15
    %s48 = scalar_lea.vmem [#allocation4], %s47
    %v49 = vld [vmem:[%s48] sm:$0x1]
    %50 = vst.msk [vmem:[#allocation7 + $0x1] sm:$0x1] %vm38, %v49
    %s51 = sadd.s32 %s28, 2
    %p52 = scmp.lt.s32.totalorder %s51, 13
    %s53 = scalar_select %p52, %s51, 13
    %s54 = sld [smem:[#allocation3 + %s53]]
    %p55 = scmp.gt.s32.totalorder %s54, 0
    %s56 = scalar_select %p55, %s54, 0
    %p57 = scmp.lt.s32.totalorder %s56, 15
    %s58 = scalar_select %p57, %s56, 15
    %s59 = scalar_lea.vmem [#allocation4], %s58
    %v60 = vld [vmem:[%s59] sm:$0x1]
    %61 = vst.msk [vmem:[#allocation7 + $0x2] sm:$0x1] %vm38, %v60
    %s62 = sadd.s32 %s28, 3
    %p63 = scmp.lt.s32.totalorder %s62, 13
    %s64 = scalar_select %p63, %s62, 13
    %s65 = sld [smem:[#allocation3 + %s64]]
    %p66 = scmp.gt.s32.totalorder %s65, 0
    %s67 = scalar_select %p66, %s65, 0
    %p68 = scmp.lt.s32.totalorder %s67, 15
    %s69 = scalar_select %p68, %s67, 15
    %s70 = scalar_lea.vmem [#allocation4], %s69
    %v71 = vld [vmem:[%s70] sm:$0x1]
    %72 = vst.msk [vmem:[#allocation7 + $0x3] sm:$0x1] %vm38, %v71
    %s73 = sadd.s32 %s28, 4
    %p74 = scmp.lt.s32.totalorder %s73, 13
    %s75 = scalar_select %p74, %s73, 13
    %s76 = sld [smem:[#allocation3 + %s75]]
    %p77 = scmp.gt.s32.totalorder %s76, 0
    %s78 = scalar_select %p77, %s76, 0
    %p79 = scmp.lt.s32.totalorder %s78, 15
    %s80 = scalar_select %p79, %s78, 15
    %s81 = scalar_lea.vmem [#allocation4], %s80
    %v82 = vld [vmem:[%s81] sm:$0x1]
    %83 = vst.msk [vmem:[#allocation7 + $0x4] sm:$0x1] %vm38, %v82
    %s84 = sadd.s32 %s28, 5
    %p85 = scmp.lt.s32.totalorder %s84, 13
    %s86 = scalar_select %p85, %s84, 13
    %s87 = sld [smem:[#allocation3 + %s86]]
    %p88 = scmp.gt.s32.totalorder %s87, 0
    %s89 = scalar_select %p88, %s87, 0
    %p90 = scmp.lt.s32.totalorder %s89, 15
    %s91 = scalar_select %p90, %s89, 15
    %s92 = scalar_lea.vmem [#allocation4], %s91
    %v93 = vld [vmem:[%s92] sm:$0x1]
    %94 = vst.msk [vmem:[#allocation7 + $0x5] sm:$0x1] %vm38, %v93
    %s95 = sadd.s32 %s28, 6
    %p96 = scmp.lt.s32.totalorder %s95, 13
    %s97 = scalar_select %p96, %s95, 13
    %s98 = sld [smem:[#allocation3 + %s97]]
    %p99 = scmp.gt.s32.totalorder %s98, 0
    %s100 = scalar_select %p99, %s98, 0
    %p101 = scmp.lt.s32.totalorder %s100, 15
    %s102 = scalar_select %p101, %s100, 15
    %s103 = scalar_lea.vmem [#allocation4], %s102
    %v104 = vld [vmem:[%s103] sm:$0x1]
    %105 = vst.msk [vmem:[#allocation7 + $0x6] sm:$0x1] %vm38, %v104
    %s106 = sadd.s32 %s28, 7
    %p107 = scmp.lt.s32.totalorder %s106, 13
    %s108 = scalar_select %p107, %s106, 13
    %s109 = sld [smem:[#allocation3 + %s108]]
    %p110 = scmp.gt.s32.totalorder %s109, 0
    %s111 = scalar_select %p110, %s109, 0
    %p112 = scmp.lt.s32.totalorder %s111, 15
    %s113 = scalar_select %p112, %s111, 15
    %s114 = scalar_lea.vmem [#allocation4], %s113
    %v115 = vld [vmem:[%s114] sm:$0x1]
    %116 = vst.msk [vmem:[#allocation7 + $0x7] sm:$0x1] %vm38, %v115
    %s117 = sadd.s32 %s28, 8
    %p118 = scmp.lt.s32.totalorder %s117, 13
    %s119 = scalar_select %p118, %s117, 13
    %s120 = sld [smem:[#allocation3 + %s119]]
    %p121 = scmp.gt.s32.totalorder %s120, 0
    %s122 = scalar_select %p121, %s120, 0
    %p123 = scmp.lt.s32.totalorder %s122, 15
    %s124 = scalar_select %p123, %s122, 15
    %s125 = scalar_lea.vmem [#allocation4], %s124
    %v126 = vld [vmem:[%s125] sm:$0x1]
    %127 = vst.msk [vmem:[#allocation7 + $0x8] sm:$0x1] %vm38, %v126
    %s128 = sadd.s32 %s28, 9
    %p129 = scmp.lt.s32.totalorder %s128, 13
    %s130 = scalar_select %p129, %s128, 13
    %s131 = sld [smem:[#allocation3 + %s130]]
    %p132 = scmp.gt.s32.totalorder %s131, 0
    %s133 = scalar_select %p132, %s131, 0
    %p134 = scmp.lt.s32.totalorder %s133, 15
    %s135 = scalar_select %p134, %s133, 15
    %s136 = scalar_lea.vmem [#allocation4], %s135
    %v137 = vld [vmem:[%s136] sm:$0x1]
    %138 = vst.msk [vmem:[#allocation7 + $0x9] sm:$0x1] %vm38, %v137
    %s139 = sadd.s32 %s28, 10
    %p140 = scmp.lt.s32.totalorder %s139, 13
    %s141 = scalar_select %p140, %s139, 13
    %s142 = sld [smem:[#allocation3 + %s141]]
    %p143 = scmp.gt.s32.totalorder %s142, 0
    %s144 = scalar_select %p143, %s142, 0
    %p145 = scmp.lt.s32.totalorder %s144, 15
    %s146 = scalar_select %p145, %s144, 15
    %s147 = scalar_lea.vmem [#allocation4], %s146
    %v148 = vld [vmem:[%s147] sm:$0x1]
    %149 = vst.msk [vmem:[#allocation7 + $0xa] sm:$0x1] %vm38, %v148
    %s150 = sadd.s32 %s28, 11
    %p151 = scmp.lt.s32.totalorder %s150, 13
    %s152 = scalar_select %p151, %s150, 13
    %s153 = sld [smem:[#allocation3 + %s152]]
    %p154 = scmp.gt.s32.totalorder %s153, 0
    %s155 = scalar_select %p154, %s153, 0
    %p156 = scmp.lt.s32.totalorder %s155, 15
    %s157 = scalar_select %p156, %s155, 15
    %s158 = scalar_lea.vmem [#allocation4], %s157
    %v159 = vld [vmem:[%s158] sm:$0x1]
    %160 = vst.msk [vmem:[#allocation7 + $0xb] sm:$0x1] %vm38, %v159
    %s161 = sadd.s32 %s28, 12
    %p162 = scmp.lt.s32.totalorder %s161, 13
    %s163 = scalar_select %p162, %s161, 13
    %s164 = sld [smem:[#allocation3 + %s163]]
    %p165 = scmp.gt.s32.totalorder %s164, 0
    %s166 = scalar_select %p165, %s164, 0
    %p167 = scmp.lt.s32.totalorder %s166, 15
    %s168 = scalar_select %p167, %s166, 15
    %s169 = scalar_lea.vmem [#allocation4], %s168
    %v170 = vld [vmem:[%s169] sm:$0x1]
    %171 = vst.msk [vmem:[#allocation7 + $0xc] sm:$0x1] %vm38, %v170
    %s172 = sadd.s32 %s28, 13
    %p173 = scmp.lt.s32.totalorder %s172, 13
    %s174 = scalar_select %p173, %s172, 13
    %s175 = sld [smem:[#allocation3 + %s174]]
    %p176 = scmp.gt.s32.totalorder %s175, 0
    %s177 = scalar_select %p176, %s175, 0
    %p178 = scmp.lt.s32.totalorder %s177, 15
    %s179 = scalar_select %p178, %s177, 15
    %s180 = scalar_lea.vmem [#allocation4], %s179
    %v181 = vld [vmem:[%s180] sm:$0x1]
    %182 = vst.msk [vmem:[#allocation7 + $0xd] sm:$0x1] %vm38, %v181
    // Predicated region
    $region10: #{tpu_custom_call.1} parent=1 // pred_check
      _
    $region11: #{tpu_custom_call.1} parent=1 // pred_check_branch
      %184 = sbr.rel (0) target = $region13
    $region12: #{tpu_custom_call.1} parent=1 // pred_region
      %s186 = ssub.s32 256, 256
      %187 = vsyncadd [#allocation6], %s186
      %s188 = sshll.u32 [#allocation7], 4
      %s189 = int_to_ptr.vmem [resolvable:$true] %s188
      %194 = dma.vmem_to_hbm [thread:$0]  %s189, 256, %s2, [#allocation6], 128, 128, 8
    $region13: #{tpu_custom_call.1} parent=1 // pred_fallthru
      _
    // Predicated region
    $region14: #{tpu_custom_call.1} parent=1 // pred_check
      _
    $region15: #{tpu_custom_call.1} parent=1 // pred_check_branch
      %196 = sbr.rel (0) target = $region17
    $region16: #{tpu_custom_call.1} parent=1 // pred_region
      %197 = dma.done [#allocation6], 256
    $region17: #{tpu_custom_call.1} parent=1 // pred_fallthru
      _
    %198 = vsyncpa [#allocation5], 1
    %199 = vsyncpa [#allocation6], 1

</llo_original>
